<compile_context>
chip_gen: v5e
topology: v5e:2x2
jax: 0.10.0
libtpu: 0.0.40
codegen_flags: <defaults>
</compile_context>

<pallas_src>
import functools

import numpy as np

import jax
import jax.numpy as jnp
from jax.experimental import pallas as pl
from jax.experimental.pallas import tpu as pltpu


def _round_up(x, m):
    return ((x + m - 1) // m) * m


def _decoder_kernel(x_ref, w0_ref, b0_ref, w1_ref, b1_ref, w2_ref, b2_ref, o_ref):
    # All three matmuls + bias adds + ReLUs fused per row tile.
    # MXU accumulation, bias-add and ReLU in f32; activations cast back to the
    # weight dtype (f32 or bf16) before the next matmul.
    x = x_ref[...]
    h = jnp.dot(x, w0_ref[...], preferred_element_type=jnp.float32) + b0_ref[...]
    h = jnp.maximum(h, 0.0).astype(w1_ref.dtype)
    h = jnp.dot(h, w1_ref[...], preferred_element_type=jnp.float32) + b1_ref[...]
    h = jnp.maximum(h, 0.0).astype(w2_ref.dtype)
    out = jnp.dot(h, w2_ref[...], preferred_element_type=jnp.float32) + b2_ref[...]
    o_ref[...] = out.astype(o_ref.dtype)


@functools.partial(jax.jit, static_argnames=("tm", "compute_dtype"))
def decoder_forward(x, params, *, tm=1024, compute_dtype=jnp.float32):
    """x: [..., input_size]. params: dict with w0,b0,w1,b1,w2,b2 (weights [in,out])."""
    w0, b0 = params["w0"], params["b0"]
    w1, b1 = params["w1"], params["b1"]
    w2, b2 = params["w2"], params["b2"]

    in_size = x.shape[-1]
    hidden = w0.shape[-1]
    out_size = w2.shape[-1]
    lead_shape = x.shape[:-1]

    x2d = x.reshape(-1, in_size).astype(compute_dtype)
    M = x2d.shape[0]

    # --- Row tiling: MXU-aligned tile, ragged last tile (no padding copy). ---
    tm = max(8, _round_up(tm, 8))
    tm_eff = min(tm, _round_up(M, 8))          # don't allocate a huge tile for tiny M
    grid = (pl.cdiv(M, tm_eff),)

    # --- Lane-dense output: pad output features to a multiple of 128. ---
    out_pad = _round_up(out_size, 128)
    if out_pad != out_size:
        w2 = jnp.pad(w2, ((0, 0), (0, out_pad - out_size)))
        b2 = jnp.pad(b2, (0, out_pad - out_size))

    # Weights streamed/stored in compute dtype; biases kept f32 (2D so they
    # broadcast inside the kernel).
    w0c = w0.astype(compute_dtype)
    w1c = w1.astype(compute_dtype)
    w2c = w2.astype(compute_dtype)
    b0_2d = b0.astype(jnp.float32).reshape(1, -1)
    b1_2d = b1.astype(jnp.float32).reshape(1, -1)
    b2_2d = b2.astype(jnp.float32).reshape(1, -1)

    # --- Explicit VMEM budget (matters on v7x's 64 MiB). ---
    itemsize = int(np.dtype(compute_dtype).itemsize)
    out_itemsize = int(np.dtype(x.dtype).itemsize)
    const_bytes = (
        (w0c.size + w1c.size + w2c.size) * itemsize
        + (b0_2d.size + b1_2d.size + b2_2d.size) * 4
    )
    stream_bytes = 2 * tm_eff * in_size * itemsize + 2 * tm_eff * out_pad * out_itemsize
    scratch_bytes = 4 * tm_eff * max(hidden, out_pad) * 4  # f32 intermediates
    needed = const_bytes + stream_bytes + scratch_bytes
    vmem_limit = int(min(64 * 2**20, max(32 * 2**20, 2 * needed)))

    flops = 2 * M * (in_size * hidden + hidden * hidden + hidden * out_pad)
    bytes_accessed = M * in_size * itemsize + M * out_pad * out_itemsize + const_bytes

    # Constant operands: index_map never changes -> single-buffer them.
    def _const_spec(shape):
        return pl.BlockSpec(shape, lambda i: (0, 0), pipeline_mode=pl.Buffered(1))

    # TODO(synk): for large hidden_size, tile w1 along K/N with an extra
    # "arbitrary" grid axis + VMEM accumulator instead of keeping it resident.
    out2d = pl.pallas_call(
        _decoder_kernel,
        out_shape=jax.ShapeDtypeStruct((M, out_pad), x.dtype),
        grid_spec=pl.GridSpec(
            grid=grid,
            in_specs=[
                pl.BlockSpec((tm_eff, in_size), lambda i: (i, 0)),  # x tile (streamed)
                _const_spec(w0c.shape),
                _const_spec(b0_2d.shape),
                _const_spec(w1c.shape),
                _const_spec(b1_2d.shape),
                _const_spec(w2c.shape),
                _const_spec(b2_2d.shape),
            ],
            out_specs=pl.BlockSpec((tm_eff, out_pad), lambda i: (i, 0)),
        ),
        compiler_params=pltpu.CompilerParams(
            dimension_semantics=("parallel",),
            vmem_limit_bytes=vmem_limit,
        ),
        cost_estimate=pl.CostEstimate(
            flops=int(flops), transcendentals=0, bytes_accessed=int(bytes_accessed)
        ),
    )(x2d, w0c, b0_2d, w1c, b1_2d, w2c, b2_2d)

    if out_pad != out_size:
        out2d = out2d[:, :out_size]
    return out2d.reshape(lead_shape + (out_size,))


def init_decoder_params(key, input_size, hidden_size, output_size, dtype=jnp.float32):
    """Deterministic synthetic params. Weights stored as [in, out] (transpose of torch)."""
    k0, k1, k2, k3, k4, k5 = jax.random.split(key, 6)
    scale0 = 1.0 / jnp.sqrt(input_size)
    scale1 = 1.0 / jnp.sqrt(hidden_size)
    return {
        "w0": jax.random.uniform(k0, (input_size, hidden_size), dtype, -scale0, scale0),
        "b0": jax.random.uniform(k1, (hidden_size,), dtype, -scale0, scale0),
        "w1": jax.random.uniform(k2, (hidden_size, hidden_size), dtype, -scale1, scale1),
        "b1": jax.random.uniform(k3, (hidden_size,), dtype, -scale1, scale1),
        "w2": jax.random.uniform(k4, (hidden_size, output_size), dtype, -scale1, scale1),
        "b2": jax.random.uniform(k5, (output_size,), dtype, -scale1, scale1),
    }


if __name__ == "__main__":
    input_size, hidden_size, output_size = 32, 64, 16
    batch, seq = 2, 8  # leading dims; flattened to M = 16 rows

    key = jax.random.PRNGKey(0)
    kx, kp = jax.random.split(key)
    x = jax.random.normal(kx, (batch, seq, input_size), jnp.float32)
    params = init_decoder_params(kp, input_size, hidden_size, output_size)

    # f32 compute path (matches the PyTorch forward exactly).
    out = decoder_forward(x, params)
    jax.block_until_ready(out)

    # Pure-JAX reference to validate semantics.
    x2d = x.reshape(-1, input_size)
    h = jnp.maximum(x2d @ params["w0"] + params["b0"], 0.0)
    h = jnp.maximum(h @ params["w1"] + params["b1"], 0.0)
    ref = (h @ params["w2"] + params["b2"]).reshape(batch, seq, output_size)

    assert out.shape == (batch, seq, output_size)
    assert jnp.allclose(out, ref, atol=1e-5, rtol=1e-5)

    # Ragged-grid path: M not a multiple of the row tile (and not of 8).
    x_ragged = jax.random.normal(kx, (3, 7, input_size), jnp.float32)
    out_ragged = decoder_forward(x_ragged, params, tm=16)
    jax.block_until_ready(out_ragged)
    xr2d = x_ragged.reshape(-1, input_size)
    hr = jnp.maximum(xr2d @ params["w0"] + params["b0"], 0.0)
    hr = jnp.maximum(hr @ params["w1"] + params["b1"], 0.0)
    ref_r = (hr @ params["w2"] + params["b2"]).reshape(3, 7, output_size)
    assert jnp.allclose(out_ragged, ref_r, atol=1e-5, rtol=1e-5)

    # bf16 streaming path (half HBM traffic / 2x MXU rate on v6e-v7x), f32 accum.
    out_bf16 = decoder_forward(x, params, compute_dtype=jnp.bfloat16)
    jax.block_until_ready(out_bf16)
    assert out_bf16.shape == (batch, seq, output_size)
    assert jnp.allclose(out_bf16, ref, atol=5e-2, rtol=5e-2)

    print("KERNEL_OK")
</pallas_src>

<mosaic_0001>
module attributes {stable_mosaic.version = 11 : i64} {
  func.func @_decoder_kernel(%arg0: i32, %arg1: memref<16x32xf32, #tpu.memory_space<vmem>>, %arg2: memref<32x64xf32, #tpu.memory_space<vmem>>, %arg3: memref<1x64xf32, #tpu.memory_space<vmem>>, %arg4: memref<64x64xf32, #tpu.memory_space<vmem>>, %arg5: memref<1x64xf32, #tpu.memory_space<vmem>>, %arg6: memref<64x128xf32, #tpu.memory_space<vmem>>, %arg7: memref<1x128xf32, #tpu.memory_space<vmem>>, %arg8: memref<16x128xf32, #tpu.memory_space<vmem>>) attributes {dimension_semantics = [#tpu.dimension_semantics<parallel>], iteration_bounds = array<i64: 1>, scalar_prefetch = 0 : i64, scratch_operands = 0 : i64, tpu.core_type = #tpu.core_type<tc>, window_params = [{transform_indices = @transform_0, window_bounds = array<i64: 16, 32>}, {pipeline_mode = #tpu.pipeline_mode<synchronous>, transform_indices = @transform_1, window_bounds = array<i64: 32, 64>}, {pipeline_mode = #tpu.pipeline_mode<synchronous>, transform_indices = @transform_2, window_bounds = array<i64: 1, 64>}, {pipeline_mode = #tpu.pipeline_mode<synchronous>, transform_indices = @transform_3, window_bounds = array<i64: 64, 64>}, {pipeline_mode = #tpu.pipeline_mode<synchronous>, transform_indices = @transform_4, window_bounds = array<i64: 1, 64>}, {pipeline_mode = #tpu.pipeline_mode<synchronous>, transform_indices = @transform_5, window_bounds = array<i64: 64, 128>}, {pipeline_mode = #tpu.pipeline_mode<synchronous>, transform_indices = @transform_6, window_bounds = array<i64: 1, 128>}, {transform_indices = @transform_7, window_bounds = array<i64: 16, 128>}]} {
    %c0 = arith.constant 0 : index
    %c0_0 = arith.constant 0 : index
    %0 = vector.load %arg1[%c0, %c0_0] : memref<16x32xf32, #tpu.memory_space<vmem>>, vector<16x32xf32>
    %c0_1 = arith.constant 0 : index
    %c0_2 = arith.constant 0 : index
    %1 = vector.load %arg2[%c0_1, %c0_2] : memref<32x64xf32, #tpu.memory_space<vmem>>, vector<32x64xf32>
    %cst = arith.constant dense<0.000000e+00> : vector<16x64xf32>
    %2 = tpu.matmul %0, %1, %cst {dimension_numbers = #tpu.dot_dimension_numbers<[1], [0], [0], [1], [0, 0, 1, 1], [], []>} : vector<16x32xf32>, vector<32x64xf32>, vector<16x64xf32> -> vector<16x64xf32>
    %c0_3 = arith.constant 0 : index
    %c0_4 = arith.constant 0 : index
    %3 = vector.load %arg3[%c0_3, %c0_4] : memref<1x64xf32, #tpu.memory_space<vmem>>, vector<1x64xf32>
    %4 = vector.broadcast %3 : vector<1x64xf32> to vector<16x64xf32>
    %5 = arith.addf %2, %4 : vector<16x64xf32>
    %cst_5 = arith.constant 0.000000e+00 : f32
    %6 = vector.broadcast %cst_5 : f32 to vector<16x64xf32>
    %7 = arith.maximumf %5, %6 : vector<16x64xf32>
    %c0_6 = arith.constant 0 : index
    %c0_7 = arith.constant 0 : index
    %8 = vector.load %arg4[%c0_6, %c0_7] : memref<64x64xf32, #tpu.memory_space<vmem>>, vector<64x64xf32>
    %cst_8 = arith.constant dense<0.000000e+00> : vector<16x64xf32>
    %9 = tpu.matmul %7, %8, %cst_8 {dimension_numbers = #tpu.dot_dimension_numbers<[1], [0], [0], [1], [0, 0, 1, 1], [], []>} : vector<16x64xf32>, vector<64x64xf32>, vector<16x64xf32> -> vector<16x64xf32>
    %c0_9 = arith.constant 0 : index
    %c0_10 = arith.constant 0 : index
    %10 = vector.load %arg5[%c0_9, %c0_10] : memref<1x64xf32, #tpu.memory_space<vmem>>, vector<1x64xf32>
    %11 = vector.broadcast %10 : vector<1x64xf32> to vector<16x64xf32>
    %12 = arith.addf %9, %11 : vector<16x64xf32>
    %cst_11 = arith.constant 0.000000e+00 : f32
    %13 = vector.broadcast %cst_11 : f32 to vector<16x64xf32>
    %14 = arith.maximumf %12, %13 : vector<16x64xf32>
    %c0_12 = arith.constant 0 : index
    %c0_13 = arith.constant 0 : index
    %15 = vector.load %arg6[%c0_12, %c0_13] : memref<64x128xf32, #tpu.memory_space<vmem>>, vector<64x128xf32>
    %cst_14 = arith.constant dense<0.000000e+00> : vector<16x128xf32>
    %16 = tpu.matmul %14, %15, %cst_14 {dimension_numbers = #tpu.dot_dimension_numbers<[1], [0], [0], [1], [0, 0, 1, 1], [], []>} : vector<16x64xf32>, vector<64x128xf32>, vector<16x128xf32> -> vector<16x128xf32>
    %c0_15 = arith.constant 0 : index
    %c0_16 = arith.constant 0 : index
    %17 = vector.load %arg7[%c0_15, %c0_16] : memref<1x128xf32, #tpu.memory_space<vmem>>, vector<1x128xf32>
    %18 = vector.broadcast %17 : vector<1x128xf32> to vector<16x128xf32>
    %19 = arith.addf %16, %18 : vector<16x128xf32>
    %c0_17 = arith.constant 0 : index
    %c0_18 = arith.constant 0 : index
    %20 = vector.load %arg8[%c0_17, %c0_18] : memref<16x128xf32, #tpu.memory_space<vmem>>, vector<16x128xf32>
    tpu.vector_store %arg8[%c0_17, %c0_18], %19 {strides = array<i32>} : memref<16x128xf32, #tpu.memory_space<vmem>>, vector<16x128xf32>,
    return
  }
  func.func @transform_0(%arg0: i32) -> (i32, i32) {
    %c0_i32 = arith.constant 0 : i32
    %c0_i32_0 = arith.constant 0 : i32
    return %arg0, %c0_i32 : i32, i32
  }
  func.func @transform_1(%arg0: i32) -> (i32, i32) {
    %c0_i32 = arith.constant 0 : i32
    %c0_i32_0 = arith.constant 0 : i32
    %c0_i32_1 = arith.constant 0 : i32
    return %c0_i32, %c0_i32_0 : i32, i32
  }
  func.func @transform_2(%arg0: i32) -> (i32, i32) {
    %c0_i32 = arith.constant 0 : i32
    %c0_i32_0 = arith.constant 0 : i32
    %c0_i32_1 = arith.constant 0 : i32
    return %c0_i32, %c0_i32_0 : i32, i32
  }
  func.func @transform_3(%arg0: i32) -> (i32, i32) {
    %c0_i32 = arith.constant 0 : i32
    %c0_i32_0 = arith.constant 0 : i32
    %c0_i32_1 = arith.constant 0 : i32
    return %c0_i32, %c0_i32_0 : i32, i32
  }
  func.func @transform_4(%arg0: i32) -> (i32, i32) {
    %c0_i32 = arith.constant 0 : i32
    %c0_i32_0 = arith.constant 0 : i32
    %c0_i32_1 = arith.constant 0 : i32
    return %c0_i32, %c0_i32_0 : i32, i32
  }
  func.func @transform_5(%arg0: i32) -> (i32, i32) {
    %c0_i32 = arith.constant 0 : i32
    %c0_i32_0 = arith.constant 0 : i32
    %c0_i32_1 = arith.constant 0 : i32
    return %c0_i32, %c0_i32_0 : i32, i32
  }
  func.func @transform_6(%arg0: i32) -> (i32, i32) {
    %c0_i32 = arith.constant 0 : i32
    %c0_i32_0 = arith.constant 0 : i32
    %c0_i32_1 = arith.constant 0 : i32
    return %c0_i32, %c0_i32_0 : i32, i32
  }
  func.func @transform_7(%arg0: i32) -> (i32, i32) {
    %c0_i32 = arith.constant 0 : i32
    %c0_i32_0 = arith.constant 0 : i32
    return %arg0, %c0_i32 : i32, i32
  }
}

</mosaic_0001>

<llo_original>
// kernel: decoder_forward.1
$region0: #{decoder_forward.1}
  #allocation0 [shape = 'u32[]', space=smem, size = 0x4, offset = 0x4, fixed_abs, tag = 'smem constant byte address 0x4 - core index']
  #allocation1 [shape = 'u32[72,128]{1,0:T(1,128)}', space=vmem, size = 0x9000, scoped, tag = 'internal scratch']
  %s0 = inlined_call_operand.vmem [shape: f32[16,32], index: 0, kind: input, shape index: {}]
  %s1 = inlined_call_operand.vmem [shape: f32[32,64], index: 1, kind: input, shape index: {}]
  %s2 = inlined_call_operand.vmem [shape: f32[1,64], index: 2, kind: input, shape index: {}]
  %s3 = inlined_call_operand.vmem [shape: f32[64,64], index: 3, kind: input, shape index: {}]
  %s4 = inlined_call_operand.vmem [shape: f32[1,64], index: 4, kind: input, shape index: {}]
  %s5 = inlined_call_operand.vmem [shape: f32[64,128], index: 5, kind: input, shape index: {}]
  %s6 = inlined_call_operand.vmem [shape: f32[1,128], index: 6, kind: input, shape index: {}]
  %s7 = inlined_call_operand.vmem [shape: f32[16,128], index: 7, kind: output, shape index: {}]
  %s8 = sld [smem:[#allocation0]]
  $region38: #{decoder_forward.1} parent=0
    _
  %s10 = ssub.s32 1, %s8
  %s11 = scalar_select 0, %s10, %s8
  // Predicated region
  $region2: #{decoder_forward.1} parent=0 // pred_check
    _
  $region3: #{decoder_forward.1} parent=0 // pred_check_branch
    %13 = sbr.rel (0) target = $region5
  $region4: #{decoder_forward.1} parent=0 // pred_region
    _
  $region5: #{decoder_forward.1} parent=0 // pred_fallthru
    _
  // Predicated region
  $region6: #{decoder_forward.1} parent=0 // pred_check
    _
  $region7: #{decoder_forward.1} parent=0 // pred_check_branch
    %15 = sbr.rel (0) target = $region9
  $region8: #{decoder_forward.1} parent=0 // pred_region
    _
  $region9: #{decoder_forward.1} parent=0 // pred_fallthru
    _
  // Predicated region
  $region10: #{decoder_forward.1} parent=0 // pred_check
    _
  $region11: #{decoder_forward.1} parent=0 // pred_check_branch
    %17 = sbr.rel (0) target = $region13
  $region12: #{decoder_forward.1} parent=0 // pred_region
    _
  $region13: #{decoder_forward.1} parent=0 // pred_fallthru
    _
  // Predicated region
  $region14: #{decoder_forward.1} parent=0 // pred_check
    _
  $region15: #{decoder_forward.1} parent=0 // pred_check_branch
    %19 = sbr.rel (0) target = $region17
  $region16: #{decoder_forward.1} parent=0 // pred_region
    _
  $region17: #{decoder_forward.1} parent=0 // pred_fallthru
    _
  // Predicated region
  $region18: #{decoder_forward.1} parent=0 // pred_check
    _
  $region19: #{decoder_forward.1} parent=0 // pred_check_branch
    %21 = sbr.rel (0) target = $region21
  $region20: #{decoder_forward.1} parent=0 // pred_region
    _
  $region21: #{decoder_forward.1} parent=0 // pred_fallthru
    _
  // Predicated region
  $region22: #{decoder_forward.1} parent=0 // pred_check
    _
  $region23: #{decoder_forward.1} parent=0 // pred_check_branch
    %23 = sbr.rel (0) target = $region25
  $region24: #{decoder_forward.1} parent=0 // pred_region
    _
  $region25: #{decoder_forward.1} parent=0 // pred_fallthru
    _
  // Predicated region
  $region26: #{decoder_forward.1} parent=0 // pred_check
    _
  $region27: #{decoder_forward.1} parent=0 // pred_check_branch
    %25 = sbr.rel (0) target = $region29
  $region28: #{decoder_forward.1} parent=0 // pred_region
    _
  $region29: #{decoder_forward.1} parent=0 // pred_fallthru
    _
  %v26 = vld [vmem:[%s0] sm:$0xff]
  %v27 = vld [vmem:[%s0 + $0x8] sm:$0xff]
  %v28 = vld [vmem:[%s1] sm:$0xff]
  %v29 = vld [vmem:[%s1 + $0x8] sm:$0xff]
  %v30 = vld [vmem:[%s1 + $0x10] sm:$0xff]
  %v31 = vld [vmem:[%s1 + $0x18] sm:$0xff]
  %v32 = vld [vmem:[%s2] sm:$0x1]
  %v34 = vperm.slane %v32, 0
  %vm36 = vcmask 261120
  %v38 = vsel %vm36, %v26, 0
  %v41 = vsel %vm36, %v27, 0
  %43 = vmatpush.msra.mxu0 0.0
  %44 = vmatpush.msra.mxu0 0.0
  %45 = vmatpush.msra.mxu0 0.0
  %46 = vmatpush.msra.mxu0 0.0
  %47 = vmatpush.msra.mxu0 0.0
  %48 = vmatpush.msra.mxu0 0.0
  %49 = vmatpush.msra.mxu0 0.0
  %50 = vmatpush.msra.mxu0 0.0
  %51 = vmatpush.msra.mxu0 0.0
  %52 = vmatpush.msra.mxu0 0.0
  %53 = vmatpush.msra.mxu0 0.0
  %54 = vmatpush.msra.mxu0 0.0
  %55 = vmatpush.msra.mxu0 %v31
  %56 = vmatpush.msra.mxu0 %v30
  %57 = vmatpush.msra.mxu0 %v29
  %58 = vmatpush.msra.mxu0 %v28
  %59 = vmatmul.f32.gmra.mxu0 %v38
  %v60 = vpop.f32.mrf.mxu0
  %v61 = vadd.f32 %v34, %v60
  %62 = vmatmul.f32.gmra.mxu0 %v41
  %v63 = vpop.f32.mrf.mxu0
  %v64 = vadd.f32 %v34, %v63
  %65 = vdwg.mxu0
  %v66 = vmax.f32 %v61, 0.0
  %v67 = vmax.f32 %v64, 0.0
  %v68 = vld [vmem:[%s3] sm:$0xff]
  %v69 = vld [vmem:[%s3 + $0x8] sm:$0xff]
  %v70 = vld [vmem:[%s3 + $0x10] sm:$0xff]
  %v71 = vld [vmem:[%s3 + $0x18] sm:$0xff]
  %v72 = vld [vmem:[%s3 + $0x20] sm:$0xff]
  %v73 = vld [vmem:[%s3 + $0x28] sm:$0xff]
  %v74 = vld [vmem:[%s3 + $0x30] sm:$0xff]
  %v75 = vld [vmem:[%s3 + $0x38] sm:$0xff]
  %v76 = vld [vmem:[%s4] sm:$0x1]
  %v78 = vperm.slane %v76, 0
  %vm80 = vcmask 523264
  %v82 = vsel %vm80, %v66, 0
  %v85 = vsel %vm80, %v67, 0
  %87 = vmatpush.msra.mxu0 0.0
  %88 = vmatpush.msra.mxu0 0.0
  %89 = vmatpush.msra.mxu0 0.0
  %90 = vmatpush.msra.mxu0 0.0
  %91 = vmatpush.msra.mxu0 0.0
  %92 = vmatpush.msra.mxu0 0.0
  %93 = vmatpush.msra.mxu0 0.0
  %94 = vmatpush.msra.mxu0 0.0
  %95 = vmatpush.msra.mxu0 %v75
  %96 = vmatpush.msra.mxu0 %v74
  %97 = vmatpush.msra.mxu0 %v73
  %98 = vmatpush.msra.mxu0 %v72
  %99 = vmatpush.msra.mxu0 %v71
  %100 = vmatpush.msra.mxu0 %v70
  %101 = vmatpush.msra.mxu0 %v69
  %102 = vmatpush.msra.mxu0 %v68
  %103 = vmatmul.f32.gmra.mxu0 %v82
  %v104 = vpop.f32.mrf.mxu0
  %v105 = vadd.f32 %v78, %v104
  %106 = vmatmul.f32.gmra.mxu0 %v85
  %v107 = vpop.f32.mrf.mxu0
  %v108 = vadd.f32 %v78, %v107
  %109 = vdwg.mxu0
  %v110 = vmax.f32 %v105, 0.0
  %v111 = vmax.f32 %v108, 0.0
  %v112 = vld [vmem:[%s5] sm:$0xff]
  %v113 = vld [vmem:[%s5 + $0x8] sm:$0xff]
  %v114 = vld [vmem:[%s5 + $0x10] sm:$0xff]
  %v115 = vld [vmem:[%s5 + $0x18] sm:$0xff]
  %v116 = vld [vmem:[%s5 + $0x20] sm:$0xff]
  %v117 = vld [vmem:[%s5 + $0x28] sm:$0xff]
  %v118 = vld [vmem:[%s5 + $0x30] sm:$0xff]
  %v119 = vld [vmem:[%s5 + $0x38] sm:$0xff]
  %v120 = vld [vmem:[%s6] sm:$0x1]
  %v122 = vperm.slane %v120, 0
  %v125 = vsel %vm80, %v110, 0
  %v128 = vsel %vm80, %v111, 0
  %130 = vmatpush.msra.mxu0 0.0
  %131 = vmatpush.msra.mxu0 0.0
  %132 = vmatpush.msra.mxu0 0.0
  %133 = vmatpush.msra.mxu0 0.0
  %134 = vmatpush.msra.mxu0 0.0
  %135 = vmatpush.msra.mxu0 0.0
  %136 = vmatpush.msra.mxu0 0.0
  %137 = vmatpush.msra.mxu0 0.0
  %138 = vmatpush.msra.mxu0 %v119
  %139 = vmatpush.msra.mxu0 %v118
  %140 = vmatpush.msra.mxu0 %v117
  %141 = vmatpush.msra.mxu0 %v116
  %142 = vmatpush.msra.mxu0 %v115
  %143 = vmatpush.msra.mxu0 %v114
  %144 = vmatpush.msra.mxu0 %v113
  %145 = vmatpush.msra.mxu0 %v112
  %146 = vmatmul.f32.gmra.mxu0 %v125
  %v147 = vpop.f32.mrf.mxu0
  %v148 = vadd.f32 %v122, %v147
  %149 = vmatmul.f32.gmra.mxu0 %v128
  %v150 = vpop.f32.mrf.mxu0
  %v151 = vadd.f32 %v122, %v150
  %152 = vdwg.mxu0
  %153 = vst [vmem:[%s7] sm:$0xff] %v148
  %154 = vst [vmem:[%s7 + $0x8] sm:$0xff] %v151
  // Predicated region
  $region30: #{decoder_forward.1} parent=0 // pred_check
    _
  $region31: #{decoder_forward.1} parent=0 // pred_check_branch
    %156 = sbr.rel (0) target = $region33
  $region32: #{decoder_forward.1} parent=0 // pred_region
    _
  $region33: #{decoder_forward.1} parent=0 // pred_fallthru
    _
  // Predicated region
  $region34: #{decoder_forward.1} parent=0 // pred_check
    _
  $region35: #{decoder_forward.1} parent=0 // pred_check_branch
    %158 = sbr.rel (0) target = $region37
  $region36: #{decoder_forward.1} parent=0 // pred_region
    _
  $region37: #{decoder_forward.1} parent=0 // pred_fallthru
    _

</llo_original>
